<compile_context>
chip_gen: v6e
topology: v6e:2x2x1
jax: 0.10.0
libtpu: 0.0.40
codegen_flags: <defaults>
</compile_context>

<pallas_src>
import numpy as np
import jax
import jax.numpy as jnp
from jax.experimental import pallas as pl
from jax.experimental.pallas import tpu as pltpu


def _make_fc_loss_kernel(weight_gain, bias_gain, block_rows, n_valid, needs_mask):
    """Build the fused forward + analytic-grad + per-tile partial-loss kernel.

    weight_gain / bias_gain / block_rows / n_valid are plain Python scalars so they are
    baked into the jaxpr as literals (closing over jnp scalars is rejected by Pallas).
    """
    weight_gain = float(weight_gain)
    bias_gain = float(bias_gain)
    block_rows = int(block_rows)
    n_valid = int(n_valid)

    def kernel(x_ref, w_ref, b_ref, wrs_ref, loss_ref):
        x = x_ref[...]                      # [bm, In]   streamed tile (f32 or bf16)
        w = w_ref[...]                      # [Out, In]  resident, raw un-scaled weight
        b = b_ref[...]                      # [1, Out]   f32
        w_rowsum = wrs_ref[...]             # [1, Out]   f32, rowsum of raw weight

        # z = weight_gain * (x @ weight.T) + bias_gain * bias
        # (no transposed / gain-scaled copy of the weight; gains are scalar post-scales)
        z_raw = jax.lax.dot_general(
            x, w,
            dimension_numbers=(((1,), (1,)), ((), ())),
            preferred_element_type=jnp.float32)               # [bm, Out]
        z = weight_gain * z_raw + bias_gain * b

        # sigmoid via tanh: one EUP transcendental per element (vs exp + reciprocal),
        # and exact f32 semantics.
        s = 0.5 * (jnp.tanh(0.5 * z) + 1.0)                   # sigmoid(z)
        ds = s * (1.0 - s)                                    # sigmoid'(z)

        if needs_mask:
            # Zero the rows of the (un-padded) final partial batch tile.
            i = pl.program_id(0)
            row = i * block_rows + jax.lax.broadcasted_iota(jnp.int32, s.shape, 0)
            valid = row < n_valid
            s = jnp.where(valid, s, 0.0)
            ds = jnp.where(valid, ds, 0.0)

        # sum(grad_x) = sum(ds @ (wg*W)) = wg * dot(colsum(ds), rowsum(W))
        # -> length-Out VPU multiply + XLU reduce; no second MXU use at all.
        ds_colsum = jnp.sum(ds, axis=0, keepdims=True)         # [1, Out]
        grad_sum = weight_gain * jnp.sum(ds_colsum * w_rowsum)

        # One scalar partial loss per grid step; independent output blocks keep the
        # batch axis race-free under "parallel" (v7x megacore).
        loss_ref[0, 0] = grad_sum + jnp.sum(s)

    return kernel


def _vmem_budget_bytes():
    """Generation-aware VMEM budget: ~3/4 of physical VMEM (headroom for compiler
    scratch): ~96 MiB on 128 MiB parts (v5e/v6e), ~48 MiB on v7x's 64 MiB."""
    try:
        capacity = int(pltpu.get_tpu_info().vmem_capacity_bytes)
    except Exception:
        capacity = 64 << 20            # conservative fallback (v7x per-core VMEM)
    return (capacity * 3) // 4


def _choose_block_rows(n, in_features, out_features, x_itemsize, row_align,
                       vmem_budget_bytes):
    """Largest batch tile that fits the VMEM budget.

    resident: weight is double-buffered by the default pipeline (constant index_map so
    it is only DMA'd once, but two buffers are allocated) + bias + rowsum(W).
    per-row : double-buffered x rows + ~4 f32 [bm, Out] intermediates (z, tanh, s, ds).
    """
    if n <= row_align:
        return n
    resident = 2 * out_features * in_features * x_itemsize + 4 * out_features * 4
    per_row = 2 * in_features * x_itemsize + 4 * out_features * 4
    max_rows = (vmem_budget_bytes - resident) // per_row
    bm = int(min(n, 2048, max(row_align, max_rows)))
    bm = max(row_align, (bm // row_align) * row_align)
    # Prefer a tile that divides n (no masked partial tile) if one is close to target.
    if n % bm != 0:
        for cand in range(bm, max(row_align, bm // 2) - 1, -row_align):
            if n % cand == 0:
                bm = cand
                break
    return bm


def fully_connected_layer_loss(x, weight, bias, lr_multiplier: float = 1.0,
                               block_rows: int | None = None,
                               use_bf16_matmul: bool = False):
    """JAX wrapper mirroring FullyConnectedLayer.forward (activation='linear', bias=True)."""
    x = jnp.asarray(x, jnp.float32)
    weight = jnp.asarray(weight, jnp.float32)
    bias = jnp.asarray(bias, jnp.float32)

    n, in_features = x.shape
    out_features = weight.shape[0]
    weight_gain = float(lr_multiplier) / float(np.sqrt(in_features))
    bias_gain = float(lr_multiplier)

    # rowsum(W) in f32 (before any bf16 cast): the grad term only needs
    # dot(colsum(ds), rowsum(W)), so the weight is never used in a second orientation.
    w_rowsum = jnp.sum(weight, axis=1).reshape(1, out_features)
    bias2d = bias.reshape(1, out_features)

    x_itemsize = 4
    row_align = 8
    if use_bf16_matmul:
        # Cast once in the wrapper (not per grid step inside the kernel): halves
        # streamed-x HBM bytes and resident-weight VMEM; f32 MXU accumulation kept.
        x = x.astype(jnp.bfloat16)
        weight = weight.astype(jnp.bfloat16)
        x_itemsize = 2
        row_align = 16                 # bf16 sublane tile

    vmem_budget = _vmem_budget_bytes()
    if block_rows is None:
        block_rows = _choose_block_rows(n, in_features, out_features, x_itemsize,
                                        row_align, vmem_budget)
    block_rows = int(block_rows)
    # TODO(synk): tile out_features on a second ("arbitrary") grid axis when the
    # resident weight exceeds the VMEM budget (hit first on v7x's 64 MiB); partial sums
    # accumulate trivially thanks to the rowsum(W) identity.

    grid_m = pl.cdiv(n, block_rows)
    needs_mask = (n % block_rows) != 0    # no jnp.pad copy of x: mask the last tile

    kernel = _make_fc_loss_kernel(weight_gain, bias_gain, block_rows, n, needs_mask)

    # TODO(synk): single-buffer the constant weight/bias/rowsum operands with
    # pipeline_mode=pl.Buffered(1) (constant index_map) once that is universally
    # supported by the top-level pallas_call pipeline; the VMEM heuristic above counts
    # the weight twice until then.  Likewise consider pl.Buffered(3) on the x spec on
    # v5e where VMEM headroom is largest.
    grid_spec = pltpu.PrefetchScalarGridSpec(
        num_scalar_prefetch=0,
        grid=(grid_m,),
        in_specs=[
            pl.BlockSpec((block_rows, in_features), lambda i: (i, 0)),    # x tile
            pl.BlockSpec((out_features, in_features), lambda i: (0, 0)),  # weight (resident)
            pl.BlockSpec((1, out_features), lambda i: (0, 0)),            # bias (resident)
            pl.BlockSpec((1, out_features), lambda i: (0, 0)),            # rowsum(W) (resident)
        ],
        # One scalar partial loss per grid step (SMEM block) -> reduced in the wrapper.
        out_specs=pl.BlockSpec((1, 1), lambda i: (i, 0), memory_space=pltpu.SMEM),
    )

    partials = pl.pallas_call(
        kernel,
        out_shape=jax.ShapeDtypeStruct((grid_m, 1), jnp.float32),
        grid_spec=grid_spec,
        compiler_params=pltpu.CompilerParams(
            # Per-step outputs are independent -> the batch axis can be sharded across
            # the two v7x TensorCores (no-op on single-TC v5e/v6e).
            dimension_semantics=("parallel",),
            vmem_limit_bytes=int(vmem_budget),
        ),
    )(x, weight, bias2d, w_rowsum)

    return jnp.sum(partials)


def _reference_loss(x, weight, bias, lr_multiplier: float = 1.0):
    """Pure-JAX reference using autodiff (mirrors the torch.autograd.grad path)."""
    wg = lr_multiplier / np.sqrt(x.shape[1])
    w = weight * wg
    b = bias * lr_multiplier

    def s_sum(xx):
        return jax.nn.sigmoid(xx @ w.T + b).sum()

    g = jax.grad(s_sum)(x)
    return g.sum() + s_sum(x)


if __name__ == "__main__":
    key = jax.random.PRNGKey(0)
    kx, kw = jax.random.split(key)

    batch, in_features, out_features = 8, 32, 16
    lr_multiplier = 1.0

    # Deterministic parameter init (module: weight ~ randn / lr_mult, bias = bias_init = 0)
    x = jax.random.normal(kx, (batch, in_features), dtype=jnp.float32)
    weight = jax.random.normal(kw, (out_features, in_features), dtype=jnp.float32) / lr_multiplier
    bias = jnp.zeros((out_features,), dtype=jnp.float32)

    loss = fully_connected_layer_loss(x, weight, bias, lr_multiplier)
    loss = jax.block_until_ready(loss)

    ref = _reference_loss(x, weight, bias, lr_multiplier)
    # Exact f32 path (tanh-based sigmoid, no approx reciprocal) -> tight tolerance.
    assert np.allclose(np.asarray(loss), np.asarray(ref), rtol=1e-4, atol=1e-4), (loss, ref)

    print("KERNEL_OK")
</pallas_src>

<mosaic_0001>
module attributes {stable_mosaic.version = 11 : i64} {
  func.func @kernel(%arg0: i32, %arg1: memref<8x32xf32, #tpu.memory_space<vmem>>, %arg2: memref<16x32xf32, #tpu.memory_space<vmem>>, %arg3: memref<1x16xf32, #tpu.memory_space<vmem>>, %arg4: memref<1x16xf32, #tpu.memory_space<vmem>>, %arg5: memref<1x1xf32, #tpu.memory_space<smem>>) attributes {dimension_semantics = [#tpu.dimension_semantics<parallel>], iteration_bounds = array<i64: 1>, scalar_prefetch = 0 : i64, scratch_operands = 0 : i64, tpu.core_type = #tpu.core_type<tc>, window_params = [{transform_indices = @transform_0, window_bounds = array<i64: 8, 32>}, {pipeline_mode = #tpu.pipeline_mode<synchronous>, transform_indices = @transform_1, window_bounds = array<i64: 16, 32>}, {pipeline_mode = #tpu.pipeline_mode<synchronous>, transform_indices = @transform_2, window_bounds = array<i64: 1, 16>}, {pipeline_mode = #tpu.pipeline_mode<synchronous>, transform_indices = @transform_3, window_bounds = array<i64: 1, 16>}, {transform_indices = @transform_4, window_bounds = array<i64: 1, 1>}]} {
    %c0 = arith.constant 0 : index
    %c0_0 = arith.constant 0 : index
    %0 = vector.load %arg1[%c0, %c0_0] : memref<8x32xf32, #tpu.memory_space<vmem>>, vector<8x32xf32>
    %c0_1 = arith.constant 0 : index
    %c0_2 = arith.constant 0 : index
    %1 = vector.load %arg2[%c0_1, %c0_2] : memref<16x32xf32, #tpu.memory_space<vmem>>, vector<16x32xf32>
    %c0_3 = arith.constant 0 : index
    %c0_4 = arith.constant 0 : index
    %2 = vector.load %arg3[%c0_3, %c0_4] : memref<1x16xf32, #tpu.memory_space<vmem>>, vector<1x16xf32>
    %c0_5 = arith.constant 0 : index
    %c0_6 = arith.constant 0 : index
    %3 = vector.load %arg4[%c0_5, %c0_6] : memref<1x16xf32, #tpu.memory_space<vmem>>, vector<1x16xf32>
    %cst = arith.constant dense<0.000000e+00> : vector<8x16xf32>
    %4 = tpu.matmul %0, %1, %cst {dimension_numbers = #tpu.dot_dimension_numbers<[1], [1], [0], [0], [0, 0, 1, 0], [], []>} : vector<8x32xf32>, vector<16x32xf32>, vector<8x16xf32> -> vector<8x16xf32>
    %cst_7 = arith.constant 0.176776692 : f32
    %5 = vector.broadcast %cst_7 : f32 to vector<8x16xf32>
    %6 = arith.mulf %5, %4 : vector<8x16xf32>
    %cst_8 = arith.constant 1.000000e+00 : f32
    %7 = vector.broadcast %cst_8 : f32 to vector<1x16xf32>
    %8 = arith.mulf %7, %2 : vector<1x16xf32>
    %9 = vector.broadcast %8 : vector<1x16xf32> to vector<8x16xf32>
    %10 = arith.addf %6, %9 : vector<8x16xf32>
    %cst_9 = arith.constant 5.000000e-01 : f32
    %11 = vector.broadcast %cst_9 : f32 to vector<8x16xf32>
    %12 = arith.mulf %11, %10 : vector<8x16xf32>
    %13 = math.tanh %12 : vector<8x16xf32>
    %cst_10 = arith.constant 1.000000e+00 : f32
    %14 = vector.broadcast %cst_10 : f32 to vector<8x16xf32>
    %15 = arith.addf %13, %14 : vector<8x16xf32>
    %cst_11 = arith.constant 5.000000e-01 : f32
    %16 = vector.broadcast %cst_11 : f32 to vector<8x16xf32>
    %17 = arith.mulf %16, %15 : vector<8x16xf32>
    %cst_12 = arith.constant 1.000000e+00 : f32
    %18 = vector.broadcast %cst_12 : f32 to vector<8x16xf32>
    %19 = arith.subf %18, %17 : vector<8x16xf32>
    %20 = arith.mulf %17, %19 : vector<8x16xf32>
    %cst_13 = arith.constant dense<0.000000e+00> : vector<16xf32>
    %21 = vector.multi_reduction <add>, %20, %cst_13 [0] : vector<8x16xf32> to vector<16xf32>
    %22 = vector.shape_cast %21 : vector<16xf32> to vector<1x16xf32>
    %23 = arith.mulf %22, %3 : vector<1x16xf32>
    %24 = vector.shape_cast %23 : vector<1x16xf32> to vector<1x1x16xf32>
    %cst_14 = arith.constant dense<0.000000e+00> : vector<1xf32>
    %25 = vector.multi_reduction <add>, %24, %cst_14 [1, 2] : vector<1x1x16xf32> to vector<1xf32>
    %26 = vector.shape_cast %25 : vector<1xf32> to vector<1x1x1xf32>
    %27 = vector.extract %26[0, 0, 0] : f32 from vector<1x1x1xf32>
    %cst_15 = arith.constant 0.176776692 : f32
    %28 = arith.mulf %cst_15, %27 : f32
    %29 = vector.shape_cast %17 : vector<8x16xf32> to vector<1x8x16xf32>
    %cst_16 = arith.constant dense<0.000000e+00> : vector<1xf32>
    %30 = vector.multi_reduction <add>, %29, %cst_16 [1, 2] : vector<1x8x16xf32> to vector<1xf32>
    %31 = vector.shape_cast %30 : vector<1xf32> to vector<1x1x1xf32>
    %32 = vector.extract %31[0, 0, 0] : f32 from vector<1x1x1xf32>
    %33 = arith.addf %28, %32 : f32
    %c0_17 = arith.constant 0 : index
    %c0_18 = arith.constant 0 : index
    %34 = memref.load %arg5[%c0_17, %c0_18] : memref<1x1xf32, #tpu.memory_space<smem>>
    memref.store %33, %arg5[%c0_17, %c0_18] : memref<1x1xf32, #tpu.memory_space<smem>>
    return
  }
  func.func @transform_0(%arg0: i32) -> (i32, i32) {
    %c0_i32 = arith.constant 0 : i32
    %c0_i32_0 = arith.constant 0 : i32
    return %arg0, %c0_i32 : i32, i32
  }
  func.func @transform_1(%arg0: i32) -> (i32, i32) {
    %c0_i32 = arith.constant 0 : i32
    %c0_i32_0 = arith.constant 0 : i32
    %c0_i32_1 = arith.constant 0 : i32
    return %c0_i32, %c0_i32_0 : i32, i32
  }
  func.func @transform_2(%arg0: i32) -> (i32, i32) {
    %c0_i32 = arith.constant 0 : i32
    %c0_i32_0 = arith.constant 0 : i32
    %c0_i32_1 = arith.constant 0 : i32
    return %c0_i32, %c0_i32_0 : i32, i32
  }
  func.func @transform_3(%arg0: i32) -> (i32, i32) {
    %c0_i32 = arith.constant 0 : i32
    %c0_i32_0 = arith.constant 0 : i32
    %c0_i32_1 = arith.constant 0 : i32
    return %c0_i32, %c0_i32_0 : i32, i32
  }
  func.func @transform_4(%arg0: i32) -> (i32, i32) {
    %c0_i32 = arith.constant 0 : i32
    %c0_i32_0 = arith.constant 0 : i32
    return %arg0, %c0_i32 : i32, i32
  }
}

</mosaic_0001>

<llo_original>
// kernel: tpu_custom_call.1
$region0: #{tpu_custom_call.1}
  #allocation0 [shape = 'u32[]', space=smem, size = 0x4, offset = 0x4, fixed_abs, tag = 'smem constant byte address 0x4 - core index']
  #allocation1 [shape = 'u32[144,128]{1,0:T(1,128)}', space=vmem, size = 0x12000, scoped, tag = 'internal scratch']
  %s0 = inlined_call_operand.hbm [shape: f32[8,32], index: 0, kind: input, shape index: {}]
  %s1 = inlined_call_operand.hbm [shape: f32[16,32], index: 1, kind: input, shape index: {}]
  %s2 = inlined_call_operand.vmem [shape: f32[1,16], index: 2, kind: input, shape index: {}]
  %s3 = inlined_call_operand.vmem [shape: f32[1,16], index: 3, kind: input, shape index: {}]
  %s4 = inlined_call_operand.hbm [shape: f32[1,1], index: 4, kind: output, shape index: {}]
  %s5 = sld [smem:[#allocation0]]
  $region34: #{tpu_custom_call.1} parent=0
    _
  %s7 = ssub.s32 1, %s5
  %s8 = scalar_select 0, %s7, %s5
  $region1: #{tpu_custom_call.1} parent=0
    #allocation2 [shape = 'u8[4096]{0}', space=vmem, size = 0x1000, scoped, tag = 'input window, operand 0, single buffered']
    #allocation3 [shape = 's32[1]{0}', space=sflag, size = 0x4, scoped, tag = 'scoped memory for tpu_custom_call.1']
    #allocation4 [shape = 's32[1]{0}', space=sflag, size = 0x4, scoped, tag = 'scoped memory for tpu_custom_call.1']
    #allocation5 [shape = 'u8[8192]{0}', space=vmem, size = 0x2000, scoped, tag = 'input window, operand 1, single buffered']
    #allocation6 [shape = 's32[1]{0}', space=sflag, size = 0x4, scoped, tag = 'scoped memory for tpu_custom_call.1']
    #allocation7 [shape = 'u8[512]{0}', space=smem, size = 0x200, scoped, tag = 'output window, operand 0, single buffered']
    %9 = vsyncpa [#allocation3], 0
    %10 = vsyncpa [#allocation6], 0
    %11 = vsyncpa [#allocation4], 0
    // Predicated region
    $region2: #{tpu_custom_call.1} parent=1 // pred_check
      _
    $region3: #{tpu_custom_call.1} parent=1 // pred_check_branch
      %13 = sbr.rel (0) target = $region5
    $region4: #{tpu_custom_call.1} parent=1 // pred_region
      %s15 = ssub.s32 128, 128
      %16 = vsyncadd [#allocation3], %s15
      %s18 = sshll.u32 [#allocation2], 4
      %s19 = int_to_ptr.vmem [resolvable:$true] %s18
      %21 = dma.hbm_to_vmem [thread:$0]  %s0, 128, %s19, [#allocation3]
    $region5: #{tpu_custom_call.1} parent=1 // pred_fallthru
      _
    // Predicated region
    $region6: #{tpu_custom_call.1} parent=1 // pred_check
      _
    $region7: #{tpu_custom_call.1} parent=1 // pred_check_branch
      %23 = sbr.rel (0) target = $region9
    $region8: #{tpu_custom_call.1} parent=1 // pred_region
      %s25 = ssub.s32 256, 256
      %26 = vsyncadd [#allocation6], %s25
      %s27 = sshll.u32 [#allocation5], 4
      %s28 = int_to_ptr.vmem [resolvable:$true] %s27
      %33 = dma.hbm_to_vmem [thread:$0]  %s1, 256, %s28, [#allocation6], 128, 128, 8
    $region9: #{tpu_custom_call.1} parent=1 // pred_fallthru
      _
    // Predicated region
    $region10: #{tpu_custom_call.1} parent=1 // pred_check
      _
    $region11: #{tpu_custom_call.1} parent=1 // pred_check_branch
      %35 = sbr.rel (0) target = $region13
    $region12: #{tpu_custom_call.1} parent=1 // pred_region
      _
    $region13: #{tpu_custom_call.1} parent=1 // pred_fallthru
      _
    // Predicated region
    $region14: #{tpu_custom_call.1} parent=1 // pred_check
      _
    $region15: #{tpu_custom_call.1} parent=1 // pred_check_branch
      %37 = sbr.rel (0) target = $region17
    $region16: #{tpu_custom_call.1} parent=1 // pred_region
      _
    $region17: #{tpu_custom_call.1} parent=1 // pred_fallthru
      _
    // Predicated region
    $region18: #{tpu_custom_call.1} parent=1 // pred_check
      _
    $region19: #{tpu_custom_call.1} parent=1 // pred_check_branch
      %39 = sbr.rel (0) target = $region21
    $region20: #{tpu_custom_call.1} parent=1 // pred_region
      %40 = dma.done [#allocation3], 128
    $region21: #{tpu_custom_call.1} parent=1 // pred_fallthru
      _
    // Predicated region
    $region22: #{tpu_custom_call.1} parent=1 // pred_check
      _
    $region23: #{tpu_custom_call.1} parent=1 // pred_check_branch
      %42 = sbr.rel (0) target = $region25
    $region24: #{tpu_custom_call.1} parent=1 // pred_region
      %43 = dma.done [#allocation6], 256
    $region25: #{tpu_custom_call.1} parent=1 // pred_fallthru
      _
    %v44 = vld [vmem:[#allocation2] sm:$0xff]
    %v45 = vld [vmem:[#allocation5] sm:$0xff]
    %v46 = vld [vmem:[#allocation5 + $0x8] sm:$0xff]
    %v47 = vld [vmem:[%s2] sm:$0x1]
    %v48 = vld [vmem:[%s3] sm:$0x1]
    %vm49 = vcmask 261120
    %v51 = vsel %vm49, %v44, 0
    %v54 = vsel %vm49, %v45, 0
    %v57 = vsel %vm49, %v46, 0
    %59 = vmatprep.subr.mxu0 0.0
    %60 = vmatpush1.xpose.msra.mxu0 0.0
    %61 = vmatprep.subr.mxu0 0.0
    %62 = vmatpush1.xpose.msra.mxu0 0.0
    %63 = vmatprep.subr.mxu0 0.0
    %64 = vmatpush1.xpose.msra.mxu0 0.0
    %65 = vmatprep.subr.mxu0 0.0
    %66 = vmatpush1.xpose.msra.mxu0 0.0
    %67 = vmatprep.subr.mxu0 0.0
    %68 = vmatpush1.xpose.msra.mxu0 0.0
    %69 = vmatprep.subr.mxu0 0.0
    %70 = vmatpush1.xpose.msra.mxu0 0.0
    %71 = vmatprep.subr.mxu0 0.0
    %72 = vmatpush1.xpose.msra.mxu0 0.0
    %73 = vmatprep.subr.mxu0 0.0
    %74 = vmatpush1.xpose.msra.mxu0 0.0
    %75 = vmatprep.subr.mxu0 0.0
    %76 = vmatpush1.xpose.msra.mxu0 0.0
    %77 = vmatprep.subr.mxu0 0.0
    %78 = vmatpush1.xpose.msra.mxu0 0.0
    %79 = vmatprep.subr.mxu0 0.0
    %80 = vmatpush1.xpose.msra.mxu0 0.0
    %81 = vmatprep.subr.mxu0 0.0
    %82 = vmatpush1.xpose.msra.mxu0 0.0
    %83 = vmatprep.subr.mxu0 0.0
    %84 = vmatpush1.xpose.msra.mxu0 0.0
    %85 = vmatprep.subr.mxu0 0.0
    %86 = vmatpush1.xpose.msra.mxu0 0.0
    %87 = vmatprep.subr.mxu0 0.0
    %88 = vmatpush1.xpose.msra.mxu0 %v57
    %89 = vmatprep.subr.mxu0 0.0
    %90 = vmatpush1.xpose.msra.mxu0 %v54
    %91 = vmatprep.subr.mxu0 0.0
    %92 = vmatpush2.xpose.msra.mxu0 0.0
    %93 = vmatprep.subr.mxu0 0.0
    %94 = vmatpush2.xpose.msra.mxu0 0.0
    %95 = vmatprep.subr.mxu0 0.0
    %96 = vmatpush2.xpose.msra.mxu0 0.0
    %97 = vmatprep.subr.mxu0 0.0
    %98 = vmatpush2.xpose.msra.mxu0 0.0
    %99 = vmatprep.subr.mxu0 0.0
    %100 = vmatpush2.xpose.msra.mxu0 0.0
    %101 = vmatprep.subr.mxu0 0.0
    %102 = vmatpush2.xpose.msra.mxu0 0.0
    %103 = vmatprep.subr.mxu0 0.0
    %104 = vmatpush2.xpose.msra.mxu0 0.0
    %105 = vmatprep.subr.mxu0 0.0
    %106 = vmatpush2.xpose.msra.mxu0 0.0
    %107 = vmatprep.subr.mxu0 0.0
    %108 = vmatpush2.xpose.msra.mxu0 0.0
    %109 = vmatprep.subr.mxu0 0.0
    %110 = vmatpush2.xpose.msra.mxu0 0.0
    %111 = vmatprep.subr.mxu0 0.0
    %112 = vmatpush2.xpose.msra.mxu0 0.0
    %113 = vmatprep.subr.mxu0 0.0
    %114 = vmatpush2.xpose.msra.mxu0 0.0
    %115 = vmatprep.subr.mxu0 0.0
    %116 = vmatpush2.xpose.msra.mxu0 0.0
    %117 = vmatprep.subr.mxu0 0.0
    %118 = vmatpush2.xpose.msra.mxu0 0.0
    %119 = vmatprep.subr.mxu0 0.0
    %120 = vmatpush2.xpose.msra.mxu0 0.0
    %121 = vmatprep.subr.mxu0 0.0
    %122 = vmatpush2.xpose.msra.mxu0 0.0
    %123 = vmatprep.mubr.f32.mxu0 0.0
    %124 = vmatmul.mubr.f32.gmra.mxu0 %v51
    %v125 = vpop.f32.mrf.mxu0
    %v126 = vadd.f32 0.0, %v125
    %v127 = vpop.f32.mrf.mxu0
    %128 = vdwg.mxu0
    %v129 = vmul.f32 %v126, 0.17677669
    %v131 = vlaneseq
    %v132 = vshrl.u32 %v131, 7
    %v133 = vsub.s32 0, %v132
    %v134 = vrot.slane %v47, %v133
    %v136 = vadd.f32 %v129, %v134
    %v137 = vmul.f32 %v136, 0.5
    %v138 = vtanh.pop %v137
    %v139 = vadd.f32 %v138, 1.0
    %v140 = vmul.f32 %v139, 0.5
    %v141 = vsub.f32 1.0, %v140
    %v142 = vmul.f32 %v140, %v141
    %vm143 = vcmask 130048
    %v144 = vsel %vm143, %v142, 0.0
    %v145 = vrot.slane %v144, 4
    %v146 = vadd.f32 %v144, %v145
    %v147 = vrot.slane %v146, 2
    %v148 = vadd.f32 %v146, %v147
    %v149 = vrot.slane %v148, 1
    %v150 = vadd.f32 %v148, %v149
    %v151 = vmul.f32 %v150, %v48
    %vm152 = vcmask 122880
    %v153 = vsel %vm152, %v151, 0.0
    %154 = vadd.xlane.f32.xlu0 %v153
    %v155 = vpop.xlane.xlu0 %154
    %v156 = vrot.slane %v155, 4
    %v157 = vadd.f32 %v155, %v156
    %v158 = vrot.slane %v157, 2
    %v159 = vadd.f32 %v157, %v158
    %v160 = vrot.slane %v159, 1
    %v161 = vadd.f32 %v159, %v160
    %s162 = vtos %v161
    %s163 = smul.f32 %s162, 0.17677669
    %v164 = vsel %vm143, %v140, 0.0
    %165 = vadd.xlane.f32.xlu0 %v164
    %v166 = vpop.xlane.xlu0 %165
    %v167 = vrot.slane %v166, 4
    %v168 = vadd.f32 %v166, %v167
    %v169 = vrot.slane %v168, 2
    %v170 = vadd.f32 %v168, %v169
    %v171 = vrot.slane %v170, 1
    %v172 = vadd.f32 %v170, %v171
    %s173 = vtos %v172
    %s174 = sadd.f32 %s163, %s173
    %s175 = scalar_lea.smem [#allocation7], 0
    %176 = sst [smem:[%s175]] %s174
    // Predicated region
    $region26: #{tpu_custom_call.1} parent=1 // pred_check
      _
    $region27: #{tpu_custom_call.1} parent=1 // pred_check_branch
      %178 = sbr.rel (0) target = $region29
    $region28: #{tpu_custom_call.1} parent=1 // pred_region
      %s180 = ssub.s32 16, 16
      %181 = vsyncadd [#allocation4], %s180
      %184 = dma.smem_to_hbm [#allocation7], 16, %s4, [#allocation4]
    $region29: #{tpu_custom_call.1} parent=1 // pred_fallthru
      _
    // Predicated region
    $region30: #{tpu_custom_call.1} parent=1 // pred_check
      _
    $region31: #{tpu_custom_call.1} parent=1 // pred_check_branch
      %186 = sbr.rel (0) target = $region33
    $region32: #{tpu_custom_call.1} parent=1 // pred_region
      %187 = dma.done [#allocation4], 16
    $region33: #{tpu_custom_call.1} parent=1 // pred_fallthru
      _
    %188 = sfence
    %189 = vsyncpa [#allocation3], 1
    %190 = vsyncpa [#allocation6], 1
    %191 = vsyncpa [#allocation4], 1

</llo_original>
